<compile_context>
chip_gen: v6e
topology: v6e:2x2x1
jax: 0.10.0
libtpu: 0.0.40
codegen_flags: <defaults>
</compile_context>

<pallas_src>
import jax
import jax.numpy as jnp
from jax import lax
from jax.experimental import pallas as pl
from jax.experimental.pallas import tpu as pltpu


def _l_spa_kernel(org_ref, enh_ref, ph_ref, pwt_ref,
                  ml_ref, mr_ref, mu_ref, md_ref, out_ref):
    # org_ref/enh_ref : (Bb, C, H, W)
    # ph_ref          : (Bb*HP, Bb*H)   block-diag row-pool, scale 1/(C*16) folded in
    # pwt_ref         : (WP, W)         col-pool, transposed (lane-dense)
    # ml/mr_ref       : (WP, WP)        column shift matrices (left / right neighbour)
    # mu/md_ref       : (Bb*HP, Bb*HP)  block-diag row shift matrices (up / down)
    # out_ref         : (Bb, HP, WP)
    bb, c, h, w = org_ref.shape
    _, hp, wp = out_ref.shape

    # Subtract first (linearity), channel-sum, flatten batch into rows.
    diff = jnp.sum(org_ref[...] - enh_ref[...], axis=1)            # (Bb, H, W)
    diff2 = diff.reshape(bb * h, w)                                 # (Bb*H, W)

    # AvgPool2d(4) of the channel-mean difference; all scaling lives in ph.
    d_rows = jnp.dot(ph_ref[...], diff2,
                     preferred_element_type=jnp.float32)            # (Bb*HP, W)
    d = lax.dot_general(d_rows, pwt_ref[...],
                        dimension_numbers=(((1,), (1,)), ((), ())),
                        preferred_element_type=jnp.float32)         # (Bb*HP, WP)

    # Zero-padded directional neighbours via resident shift matrices (MXU).
    left_n = jnp.dot(d, ml_ref[...], preferred_element_type=jnp.float32)
    right_n = jnp.dot(d, mr_ref[...], preferred_element_type=jnp.float32)
    up_n = jnp.dot(mu_ref[...], d, preferred_element_type=jnp.float32)
    down_n = jnp.dot(md_ref[...], d, preferred_element_type=jnp.float32)

    e = ((d - left_n) ** 2 + (d - right_n) ** 2
         + (d - up_n) ** 2 + (d - down_n) ** 2)                     # (Bb*HP, WP)
    out_ref[...] = e.reshape(bb, hp, wp)


def _pick_block_b(b, c, h, w, input_budget_bytes):
    """Largest divisor of b whose double-buffered input blocks fit the budget,
    preferring a grid of length >= 2 so the 2-TC/megacore split can apply."""
    per_img = 2 * 2 * c * h * w * 4        # 2 inputs x 2 pipeline buffers x f32
    best = 1
    for cand in range(b, 0, -1):
        if b % cand:
            continue
        if cand * per_img > input_budget_bytes:
            continue
        if b >= 2 and b // cand < 2:
            continue
        best = cand
        break
    return best


def l_spa(org, enhance, *, block_b=None):
    """org, enhance: (B, C, H, W). Returns E: (B, 1, H//4, W//4) float32."""
    org = org.astype(jnp.float32)
    enhance = enhance.astype(jnp.float32)
    b, c, h, w = org.shape
    if h % 4 or w % 4:
        raise ValueError("H and W must be multiples of 4 (AvgPool2d(4)).")
    hp, wp = h // 4, w // 4

    if block_b is None:
        block_b = _pick_block_b(b, c, h, w, input_budget_bytes=16 * 1024 * 1024)
    bb = block_b
    assert b % bb == 0
    steps = b // bb

    f32 = jnp.float32
    scale = 1.0 / (c * 16.0)               # channel mean * 4x4 average pool
    # Row pooling (block-diagonal over the Bb images), scale folded in.
    ph = jnp.kron(jnp.eye(bb * hp, dtype=f32),
                  jnp.full((1, 4), scale, f32))                     # (Bb*HP, Bb*H)
    # Column pooling, transposed so its VMEM tile is lane-dense.
    pwt = jnp.kron(jnp.eye(wp, dtype=f32), jnp.ones((1, 4), f32))   # (WP, W)
    # Directional shift matrices (zero padding at each image's border).
    m_left = jnp.eye(wp, k=1, dtype=f32)    # (d @ m_left)[:, j]  = d[:, j-1]
    m_right = jnp.eye(wp, k=-1, dtype=f32)  # (d @ m_right)[:, j] = d[:, j+1]
    m_up = jnp.kron(jnp.eye(bb, dtype=f32), jnp.eye(hp, k=-1, dtype=f32))
    m_down = jnp.kron(jnp.eye(bb, dtype=f32), jnp.eye(hp, k=1, dtype=f32))

    const_bytes = 4 * int(ph.size + pwt.size + m_left.size + m_right.size
                          + m_up.size + m_down.size)
    per_step_input_bytes = 2 * bb * c * h * w * 4
    # 32 MiB is safe on v5e/v6e (128 MiB physical) and v7x (64 MiB physical),
    # and above v5e's 16 MiB default scoped limit.
    vmem_limit = max(32 * 1024 * 1024,
                     int(2.5 * per_step_input_bytes) + 2 * const_bytes)

    matmul_flops = steps * (
        2 * (bb * hp) * (bb * h) * w + 2 * (bb * hp) * w * wp
        + 2 * 2 * (bb * hp) * wp * wp + 2 * 2 * (bb * hp) * (bb * hp) * wp)
    flops = matmul_flops + 2 * b * c * h * w + 12 * b * hp * wp
    bytes_accessed = 2 * b * c * h * w * 4 + b * hp * wp * 4 + const_bytes

    out = pl.pallas_call(
        _l_spa_kernel,
        out_shape=jax.ShapeDtypeStruct((b, hp, wp), f32),
        grid_spec=pltpu.PrefetchScalarGridSpec(
            num_scalar_prefetch=0,
            grid=(steps,),
            in_specs=[
                pl.BlockSpec((bb, c, h, w), lambda i: (i, 0, 0, 0)),
                pl.BlockSpec((bb, c, h, w), lambda i: (i, 0, 0, 0)),
                pl.BlockSpec((bb * hp, bb * h), lambda i: (0, 0)),
                pl.BlockSpec((wp, w), lambda i: (0, 0)),
                pl.BlockSpec((wp, wp), lambda i: (0, 0)),
                pl.BlockSpec((wp, wp), lambda i: (0, 0)),
                pl.BlockSpec((bb * hp, bb * hp), lambda i: (0, 0)),
                pl.BlockSpec((bb * hp, bb * hp), lambda i: (0, 0)),
            ],
            out_specs=pl.BlockSpec((bb, hp, wp), lambda i: (i, 0, 0)),
        ),
        compiler_params=pltpu.CompilerParams(
            dimension_semantics=("parallel",),
            vmem_limit_bytes=int(vmem_limit)),
        cost_estimate=pl.CostEstimate(
            flops=int(flops), transcendentals=0,
            bytes_accessed=int(bytes_accessed)),
    )(org, enhance, ph, pwt, m_left, m_right, m_up, m_down)

    return out.reshape(b, 1, hp, wp)       # NCHW, matching the PyTorch module


def _ref_l_spa(org, enhance):
    """Pure-JAX reference mirroring the PyTorch forward (returned E only)."""
    om = jnp.mean(org, axis=1, keepdims=True)
    em = jnp.mean(enhance, axis=1, keepdims=True)

    def pool(x):
        bs, ch, hh, ww = x.shape
        return x.reshape(bs, ch, hh // 4, 4, ww // 4, 4).mean(axis=(3, 5))

    d = pool(om) - pool(em)
    dp = jnp.pad(d, ((0, 0), (0, 0), (1, 1), (1, 1)))
    left_n = dp[:, :, 1:-1, 0:-2]
    right_n = dp[:, :, 1:-1, 2:]
    up_n = dp[:, :, 0:-2, 1:-1]
    down_n = dp[:, :, 2:, 1:-1]
    return ((d - left_n) ** 2 + (d - right_n) ** 2
            + (d - up_n) ** 2 + (d - down_n) ** 2)


if __name__ == "__main__":
    key = jax.random.PRNGKey(0)
    k1, k2 = jax.random.split(key)
    B, C, H, W = 2, 4, 16, 16
    org = jax.random.uniform(k1, (B, C, H, W), dtype=jnp.float32)
    enhance = jax.random.uniform(k2, (B, C, H, W), dtype=jnp.float32)

    e = jax.block_until_ready(l_spa(org, enhance))
    e_ref = _ref_l_spa(org, enhance)

    assert e.shape == (B, 1, H // 4, W // 4), e.shape
    err = float(jnp.max(jnp.abs(e - e_ref)))
    assert err < 1e-4, err
    print("KERNEL_OK")
</pallas_src>

<mosaic_0001>
module attributes {stable_mosaic.version = 11 : i64} {
  func.func @_l_spa_kernel(%arg0: i32, %arg1: memref<1x4x16x16xf32, #tpu.memory_space<vmem>>, %arg2: memref<1x4x16x16xf32, #tpu.memory_space<vmem>>, %arg3: memref<4x16xf32, #tpu.memory_space<vmem>>, %arg4: memref<4x16xf32, #tpu.memory_space<vmem>>, %arg5: memref<4x4xf32, #tpu.memory_space<vmem>>, %arg6: memref<4x4xf32, #tpu.memory_space<vmem>>, %arg7: memref<4x4xf32, #tpu.memory_space<vmem>>, %arg8: memref<4x4xf32, #tpu.memory_space<vmem>>, %arg9: memref<1x4x4xf32, #tpu.memory_space<vmem>>) attributes {dimension_semantics = [#tpu.dimension_semantics<parallel>], iteration_bounds = array<i64: 2>, scalar_prefetch = 0 : i64, scratch_operands = 0 : i64, tpu.core_type = #tpu.core_type<tc>, window_params = [{transform_indices = @transform_0, window_bounds = array<i64: 1, 4, 16, 16>}, {transform_indices = @transform_1, window_bounds = array<i64: 1, 4, 16, 16>}, {pipeline_mode = #tpu.pipeline_mode<synchronous>, transform_indices = @transform_2, window_bounds = array<i64: 4, 16>}, {pipeline_mode = #tpu.pipeline_mode<synchronous>, transform_indices = @transform_3, window_bounds = array<i64: 4, 16>}, {pipeline_mode = #tpu.pipeline_mode<synchronous>, transform_indices = @transform_4, window_bounds = array<i64: 4, 4>}, {pipeline_mode = #tpu.pipeline_mode<synchronous>, transform_indices = @transform_5, window_bounds = array<i64: 4, 4>}, {pipeline_mode = #tpu.pipeline_mode<synchronous>, transform_indices = @transform_6, window_bounds = array<i64: 4, 4>}, {pipeline_mode = #tpu.pipeline_mode<synchronous>, transform_indices = @transform_7, window_bounds = array<i64: 4, 4>}, {transform_indices = @transform_8, window_bounds = array<i64: 1, 4, 4>}]} {
    %c0 = arith.constant 0 : index
    %c0_0 = arith.constant 0 : index
    %c0_1 = arith.constant 0 : index
    %c0_2 = arith.constant 0 : index
    %0 = vector.load %arg1[%c0, %c0_0, %c0_1, %c0_2] : memref<1x4x16x16xf32, #tpu.memory_space<vmem>>, vector<1x4x16x16xf32>
    %c0_3 = arith.constant 0 : index
    %c0_4 = arith.constant 0 : index
    %c0_5 = arith.constant 0 : index
    %c0_6 = arith.constant 0 : index
    %1 = vector.load %arg2[%c0_3, %c0_4, %c0_5, %c0_6] : memref<1x4x16x16xf32, #tpu.memory_space<vmem>>, vector<1x4x16x16xf32>
    %2 = arith.subf %0, %1 : vector<1x4x16x16xf32>
    %cst = arith.constant dense<0.000000e+00> : vector<1x16x16xf32>
    %3 = vector.multi_reduction <add>, %2, %cst [1] : vector<1x4x16x16xf32> to vector<1x16x16xf32>
    %4 = vector.shape_cast %3 : vector<1x16x16xf32> to vector<16x16xf32>
    %c0_7 = arith.constant 0 : index
    %c0_8 = arith.constant 0 : index
    %5 = vector.load %arg3[%c0_7, %c0_8] : memref<4x16xf32, #tpu.memory_space<vmem>>, vector<4x16xf32>
    %cst_9 = arith.constant dense<0.000000e+00> : vector<4x16xf32>
    %6 = tpu.matmul %5, %4, %cst_9 {dimension_numbers = #tpu.dot_dimension_numbers<[1], [0], [0], [1], [0, 0, 1, 1], [], []>} : vector<4x16xf32>, vector<16x16xf32>, vector<4x16xf32> -> vector<4x16xf32>
    %c0_10 = arith.constant 0 : index
    %c0_11 = arith.constant 0 : index
    %7 = vector.load %arg4[%c0_10, %c0_11] : memref<4x16xf32, #tpu.memory_space<vmem>>, vector<4x16xf32>
    %cst_12 = arith.constant dense<0.000000e+00> : vector<4x4xf32>
    %8 = tpu.matmul %6, %7, %cst_12 {dimension_numbers = #tpu.dot_dimension_numbers<[1], [1], [0], [0], [0, 0, 1, 0], [], []>} : vector<4x16xf32>, vector<4x16xf32>, vector<4x4xf32> -> vector<4x4xf32>
    %c0_13 = arith.constant 0 : index
    %c0_14 = arith.constant 0 : index
    %9 = vector.load %arg5[%c0_13, %c0_14] : memref<4x4xf32, #tpu.memory_space<vmem>>, vector<4x4xf32>
    %cst_15 = arith.constant dense<0.000000e+00> : vector<4x4xf32>
    %10 = tpu.matmul %8, %9, %cst_15 {dimension_numbers = #tpu.dot_dimension_numbers<[1], [0], [0], [1], [0, 0, 1, 1], [], []>} : vector<4x4xf32>, vector<4x4xf32>, vector<4x4xf32> -> vector<4x4xf32>
    %c0_16 = arith.constant 0 : index
    %c0_17 = arith.constant 0 : index
    %11 = vector.load %arg6[%c0_16, %c0_17] : memref<4x4xf32, #tpu.memory_space<vmem>>, vector<4x4xf32>
    %cst_18 = arith.constant dense<0.000000e+00> : vector<4x4xf32>
    %12 = tpu.matmul %8, %11, %cst_18 {dimension_numbers = #tpu.dot_dimension_numbers<[1], [0], [0], [1], [0, 0, 1, 1], [], []>} : vector<4x4xf32>, vector<4x4xf32>, vector<4x4xf32> -> vector<4x4xf32>
    %c0_19 = arith.constant 0 : index
    %c0_20 = arith.constant 0 : index
    %13 = vector.load %arg7[%c0_19, %c0_20] : memref<4x4xf32, #tpu.memory_space<vmem>>, vector<4x4xf32>
    %cst_21 = arith.constant dense<0.000000e+00> : vector<4x4xf32>
    %14 = tpu.matmul %13, %8, %cst_21 {dimension_numbers = #tpu.dot_dimension_numbers<[1], [0], [0], [1], [0, 0, 1, 1], [], []>} : vector<4x4xf32>, vector<4x4xf32>, vector<4x4xf32> -> vector<4x4xf32>
    %c0_22 = arith.constant 0 : index
    %c0_23 = arith.constant 0 : index
    %15 = vector.load %arg8[%c0_22, %c0_23] : memref<4x4xf32, #tpu.memory_space<vmem>>, vector<4x4xf32>
    %cst_24 = arith.constant dense<0.000000e+00> : vector<4x4xf32>
    %16 = tpu.matmul %15, %8, %cst_24 {dimension_numbers = #tpu.dot_dimension_numbers<[1], [0], [0], [1], [0, 0, 1, 1], [], []>} : vector<4x4xf32>, vector<4x4xf32>, vector<4x4xf32> -> vector<4x4xf32>
    %17 = arith.subf %8, %10 : vector<4x4xf32>
    %18 = arith.mulf %17, %17 : vector<4x4xf32>
    %19 = arith.subf %8, %12 : vector<4x4xf32>
    %20 = arith.mulf %19, %19 : vector<4x4xf32>
    %21 = arith.addf %18, %20 : vector<4x4xf32>
    %22 = arith.subf %8, %14 : vector<4x4xf32>
    %23 = arith.mulf %22, %22 : vector<4x4xf32>
    %24 = arith.addf %21, %23 : vector<4x4xf32>
    %25 = arith.subf %8, %16 : vector<4x4xf32>
    %26 = arith.mulf %25, %25 : vector<4x4xf32>
    %27 = arith.addf %24, %26 : vector<4x4xf32>
    %28 = vector.shape_cast %27 : vector<4x4xf32> to vector<1x4x4xf32>
    %c0_25 = arith.constant 0 : index
    %c0_26 = arith.constant 0 : index
    %c0_27 = arith.constant 0 : index
    %29 = vector.load %arg9[%c0_25, %c0_26, %c0_27] : memref<1x4x4xf32, #tpu.memory_space<vmem>>, vector<1x4x4xf32>
    tpu.vector_store %arg9[%c0_25, %c0_26, %c0_27], %28 {strides = array<i32>} : memref<1x4x4xf32, #tpu.memory_space<vmem>>, vector<1x4x4xf32>,
    return
  }
  func.func @transform_0(%arg0: i32) -> (i32, i32, i32, i32) {
    %c0_i32 = arith.constant 0 : i32
    %c0_i32_0 = arith.constant 0 : i32
    %c0_i32_1 = arith.constant 0 : i32
    %c0_i32_2 = arith.constant 0 : i32
    return %arg0, %c0_i32, %c0_i32_0, %c0_i32_1 : i32, i32, i32, i32
  }
  func.func @transform_1(%arg0: i32) -> (i32, i32, i32, i32) {
    %c0_i32 = arith.constant 0 : i32
    %c0_i32_0 = arith.constant 0 : i32
    %c0_i32_1 = arith.constant 0 : i32
    %c0_i32_2 = arith.constant 0 : i32
    return %arg0, %c0_i32, %c0_i32_0, %c0_i32_1 : i32, i32, i32, i32
  }
  func.func @transform_2(%arg0: i32) -> (i32, i32) {
    %c0_i32 = arith.constant 0 : i32
    %c0_i32_0 = arith.constant 0 : i32
    %c0_i32_1 = arith.constant 0 : i32
    return %c0_i32, %c0_i32_0 : i32, i32
  }
  func.func @transform_3(%arg0: i32) -> (i32, i32) {
    %c0_i32 = arith.constant 0 : i32
    %c0_i32_0 = arith.constant 0 : i32
    %c0_i32_1 = arith.constant 0 : i32
    return %c0_i32, %c0_i32_0 : i32, i32
  }
  func.func @transform_4(%arg0: i32) -> (i32, i32) {
    %c0_i32 = arith.constant 0 : i32
    %c0_i32_0 = arith.constant 0 : i32
    %c0_i32_1 = arith.constant 0 : i32
    return %c0_i32, %c0_i32_0 : i32, i32
  }
  func.func @transform_5(%arg0: i32) -> (i32, i32) {
    %c0_i32 = arith.constant 0 : i32
    %c0_i32_0 = arith.constant 0 : i32
    %c0_i32_1 = arith.constant 0 : i32
    return %c0_i32, %c0_i32_0 : i32, i32
  }
  func.func @transform_6(%arg0: i32) -> (i32, i32) {
    %c0_i32 = arith.constant 0 : i32
    %c0_i32_0 = arith.constant 0 : i32
    %c0_i32_1 = arith.constant 0 : i32
    return %c0_i32, %c0_i32_0 : i32, i32
  }
  func.func @transform_7(%arg0: i32) -> (i32, i32) {
    %c0_i32 = arith.constant 0 : i32
    %c0_i32_0 = arith.constant 0 : i32
    %c0_i32_1 = arith.constant 0 : i32
    return %c0_i32, %c0_i32_0 : i32, i32
  }
  func.func @transform_8(%arg0: i32) -> (i32, i32, i32) {
    %c0_i32 = arith.constant 0 : i32
    %c0_i32_0 = arith.constant 0 : i32
    %c0_i32_1 = arith.constant 0 : i32
    return %arg0, %c0_i32, %c0_i32_0 : i32, i32, i32
  }
}

</mosaic_0001>

<llo_original>
// kernel: tpu_custom_call.1
$region0: #{tpu_custom_call.1}
  #allocation0 [shape = 'u32[]', space=smem, size = 0x4, offset = 0x4, fixed_abs, tag = 'smem constant byte address 0x4 - core index']
  #allocation1 [shape = 'u32[144,128]{1,0:T(1,128)}', space=vmem, size = 0x12000, scoped, tag = 'internal scratch']
  %s0 = inlined_call_operand.hbm [shape: f32[2,4,16,16], index: 0, kind: input, shape index: {}]
  %s1 = inlined_call_operand.hbm [shape: f32[2,4,16,16], index: 1, kind: input, shape index: {}]
  %s2 = inlined_call_operand.hbm [shape: f32[4,16], index: 2, kind: input, shape index: {}]
  %s3 = inlined_call_operand.vmem [shape: f32[4,16], index: 3, kind: input, shape index: {}]
  %s4 = inlined_call_operand.hbm [shape: f32[4,4], index: 4, kind: input, shape index: {}]
  %s5 = inlined_call_operand.vmem [shape: f32[4,4], index: 5, kind: input, shape index: {}]
  %s6 = inlined_call_operand.hbm [shape: f32[4,4], index: 6, kind: input, shape index: {}]
  %s7 = inlined_call_operand.vmem [shape: f32[4,4], index: 7, kind: input, shape index: {}]
  %s8 = inlined_call_operand.hbm [shape: f32[2,4,4], index: 8, kind: output, shape index: {}]
  %s9 = sld [smem:[#allocation0]]
  $region85: #{tpu_custom_call.1} parent=0
    _
  %s11 = ssub.s32 1, %s9
  %s12 = scalar_select 0, %s11, %s9
  $region1: #{tpu_custom_call.1} parent=0
    #allocation2 [shape = 'u8[65536]{0}', space=vmem, size = 0x10000, scoped, tag = 'input window, operand 0']
    #allocation3 [shape = 's32[2]{0}', space=sflag, size = 0x8, scoped, tag = 'scoped memory for tpu_custom_call.1']
    #allocation4 [shape = 's32[2]{0}', space=sflag, size = 0x8, scoped, tag = 'scoped memory for tpu_custom_call.1']
    #allocation5 [shape = 'u8[65536]{0}', space=vmem, size = 0x10000, scoped, tag = 'input window, operand 1']
    #allocation6 [shape = 's32[2]{0}', space=sflag, size = 0x8, scoped, tag = 'scoped memory for tpu_custom_call.1']
    #allocation7 [shape = 'u8[2048]{0}', space=vmem, size = 0x800, scoped, tag = 'input window, operand 2, single buffered']
    #allocation8 [shape = 'u8[2048]{0}', space=vmem, size = 0x800, scoped, tag = 'input window, operand 4, single buffered']
    #allocation9 [shape = 's32[1]{0}', space=sflag, size = 0x4, scoped, tag = 'scoped memory for tpu_custom_call.1']
    #allocation10 [shape = 'u8[2048]{0}', space=vmem, size = 0x800, scoped, tag = 'input window, operand 6, single buffered']
    #allocation11 [shape = 'u8[4096]{0}', space=vmem, size = 0x1000, scoped, tag = 'output window, operand 0']
    %13 = vsyncpa [#allocation3], 0
    %s14 = scalar_lea.sflag [#allocation3], 1
    %15 = vsyncpa %s14, 0
    %16 = vsyncpa [#allocation6], 0
    %s17 = scalar_lea.sflag [#allocation6], 1
    %18 = vsyncpa %s17, 0
    %19 = vsyncpa [#allocation9], 0
    %20 = vsyncpa [#allocation4], 0
    %s21 = scalar_lea.sflag [#allocation4], 1
    %22 = vsyncpa %s21, 0
    loop: start=0, step=1, limit=4
    $region2: #{tpu_custom_call.1} parent=1 // loop_pre_header
      _
    $region3: #{tpu_custom_call.1} parent=1 // loop_header
      %s24 = sphi 0, %s28
      %p25 = scmp.ge.s32.totalorder %s24, 4
      %s34 = sphi 0, %s36
      %s37 = sphi 0, %s34
      %s38 = sphi 0, %s37
      %s54 = sphi 0, %s38
      %s60 = sphi 0, %s62
      %s63 = sphi 0, %s60
      %s64 = sphi 0, %s63
      %s80 = sphi 0, %s64
      %s84 = sphi 0, %s84
      %s86 = sphi 0, %s84
      %s87 = sphi 0, %s86
      %s101 = sphi 0, %s87
      %s105 = sphi 0, %s105
      %s107 = sphi 0, %s105
      %s108 = sphi 0, %s107
      %s122 = sphi 0, %s108
      %s126 = sphi 0, %s126
      %s128 = sphi 0, %s126
      %s129 = sphi 0, %s128
      %s143 = sphi 0, %s129
      %s147 = sphi 0, %s147
      %s149 = sphi 0, %s147
      %s150 = sphi 0, %s149
      %s164 = sphi 0, %s150
      %s168 = sphi 0, %s168
      %s170 = sphi 0, %s168
      %s171 = sphi 0, %s170
      %s185 = sphi 0, %s171
      %s189 = sphi 0, %s189
      %s191 = sphi 0, %s189
      %s192 = sphi 0, %s191
      %s206 = sphi 0, %s192
      %s212 = sphi 0, %s214
      %s215 = sphi 0, %s212
      %s216 = sphi 0, %s215
      %s232 = sphi 0, %s216
    $region4: #{tpu_custom_call.1} parent=1 // loop_header_branch
      %27 = sbr.rel (%p25) target = $region8
    $region5: #{tpu_custom_call.1} parent=1 // loop_body
      %s29 = ssub.s32 %s24, 1
      %s30 = ssub.s32 %s24, 2
      %s31 = sadd.s32 %s24, 1
      %s32 = ssub.s32 %s24, %s31
      %p33 = scmp.eq.s32.totalorder %s32, 0
      %s35 = sadd.s32 %s34, 1
      %s36 = scalar_select %p33, %s34, %s35
      %p39 = pneg %p33
      %p40 = scmp.eq.s32.totalorder %s24, 1
      %p41 = por %p39, %p40
      %p42 = scmp.ne.s32.totalorder %s34, %s37
      %p43 = scmp.eq.s32.totalorder %s24, 0
      %p44 = por %p42, %p43
      %p45 = scmp.ne.s32.totalorder %s34, %s37
      %p46 = scmp.eq.s32.totalorder %s29, 1
      %p47 = por %p45, %p46
      %p48 = scmp.ne.s32.totalorder %s37, %s38
      %p49 = scmp.eq.s32.totalorder %s29, 0
      %p50 = por %p48, %p49
      %p51 = scmp.ne.s32.totalorder %s37, %s38
      %p52 = scmp.eq.s32.totalorder %s30, 1
      %p53 = por %p51, %p52
      %p55 = scmp.ne.s32.totalorder %s38, %s54
      %p56 = scmp.eq.s32.totalorder %s30, 0
      %p57 = por %p55, %p56
      %s58 = ssub.s32 %s24, %s31
      %p59 = scmp.eq.s32.totalorder %s58, 0
      %s61 = sadd.s32 %s60, 1
      %s62 = scalar_select %p59, %s60, %s61
      %p65 = pneg %p59
      %p66 = scmp.eq.s32.totalorder %s24, 1
      %p67 = por %p65, %p66
      %p68 = scmp.ne.s32.totalorder %s60, %s63
      %p69 = scmp.eq.s32.totalorder %s24, 0
      %p70 = por %p68, %p69
      %p71 = scmp.ne.s32.totalorder %s60, %s63
      %p72 = scmp.eq.s32.totalorder %s29, 1
      %p73 = por %p71, %p72
      %p74 = scmp.ne.s32.totalorder %s63, %s64
      %p75 = scmp.eq.s32.totalorder %s29, 0
      %p76 = por %p74, %p75
      %p77 = scmp.ne.s32.totalorder %s63, %s64
      %p78 = scmp.eq.s32.totalorder %s30, 1
      %p79 = por %p77, %p78
      %p81 = scmp.ne.s32.totalorder %s64, %s80
      %p82 = scmp.eq.s32.totalorder %s30, 0
      %p83 = por %p81, %p82
      %s85 = sadd.s32 %s84, 1
      %p88 = scmp.eq.s32.totalorder %s24, 1
      %p89 = scmp.ne.s32.totalorder %s84, %s86
      %p90 = scmp.eq.s32.totalorder %s24, 0
      %p91 = por %p89, %p90
      %p92 = scmp.ne.s32.totalorder %s84, %s86
      %p93 = scmp.eq.s32.totalorder %s29, 1
      %p94 = por %p92, %p93
      %p95 = scmp.ne.s32.totalorder %s86, %s87
      %p96 = scmp.eq.s32.totalorder %s29, 0
      %p97 = por %p95, %p96
      %p98 = scmp.ne.s32.totalorder %s86, %s87
      %p99 = scmp.eq.s32.totalorder %s30, 1
      %p100 = por %p98, %p99
      %p102 = scmp.ne.s32.totalorder %s87, %s101
      %p103 = scmp.eq.s32.totalorder %s30, 0
      %p104 = por %p102, %p103
      %s106 = sadd.s32 %s105, 1
      %p109 = scmp.eq.s32.totalorder %s24, 1
      %p110 = scmp.ne.s32.totalorder %s105, %s107
      %p111 = scmp.eq.s32.totalorder %s24, 0
      %p112 = por %p110, %p111
      %p113 = scmp.ne.s32.totalorder %s105, %s107
      %p114 = scmp.eq.s32.totalorder %s29, 1
      %p115 = por %p113, %p114
      %p116 = scmp.ne.s32.totalorder %s107, %s108
      %p117 = scmp.eq.s32.totalorder %s29, 0
      %p118 = por %p116, %p117
      %p119 = scmp.ne.s32.totalorder %s107, %s108
      %p120 = scmp.eq.s32.totalorder %s30, 1
      %p121 = por %p119, %p120
      %p123 = scmp.ne.s32.totalorder %s108, %s122
      %p124 = scmp.eq.s32.totalorder %s30, 0
      %p125 = por %p123, %p124
      %s127 = sadd.s32 %s126, 1
      %p130 = scmp.eq.s32.totalorder %s24, 1
      %p131 = scmp.ne.s32.totalorder %s126, %s128
      %p132 = scmp.eq.s32.totalorder %s24, 0
      %p133 = por %p131, %p132
      %p134 = scmp.ne.s32.totalorder %s126, %s128
      %p135 = scmp.eq.s32.totalorder %s29, 1
      %p136 = por %p134, %p135
      %p137 = scmp.ne.s32.totalorder %s128, %s129
      %p138 = scmp.eq.s32.totalorder %s29, 0
      %p139 = por %p137, %p138
      %p140 = scmp.ne.s32.totalorder %s128, %s129
      %p141 = scmp.eq.s32.totalorder %s30, 1
      %p142 = por %p140, %p141
      %p144 = scmp.ne.s32.totalorder %s129, %s143
      %p145 = scmp.eq.s32.totalorder %s30, 0
      %p146 = por %p144, %p145
      %s148 = sadd.s32 %s147, 1
      %p151 = scmp.eq.s32.totalorder %s24, 1
      %p152 = scmp.ne.s32.totalorder %s147, %s149
      %p153 = scmp.eq.s32.totalorder %s24, 0
      %p154 = por %p152, %p153
      %p155 = scmp.ne.s32.totalorder %s147, %s149
      %p156 = scmp.eq.s32.totalorder %s29, 1
      %p157 = por %p155, %p156
      %p158 = scmp.ne.s32.totalorder %s149, %s150
      %p159 = scmp.eq.s32.totalorder %s29, 0
      %p160 = por %p158, %p159
      %p161 = scmp.ne.s32.totalorder %s149, %s150
      %p162 = scmp.eq.s32.totalorder %s30, 1
      %p163 = por %p161, %p162
      %p165 = scmp.ne.s32.totalorder %s150, %s164
      %p166 = scmp.eq.s32.totalorder %s30, 0
      %p167 = por %p165, %p166
      %s169 = sadd.s32 %s168, 1
      %p172 = scmp.eq.s32.totalorder %s24, 1
      %p173 = scmp.ne.s32.totalorder %s168, %s170
      %p174 = scmp.eq.s32.totalorder %s24, 0
      %p175 = por %p173, %p174
      %p176 = scmp.ne.s32.totalorder %s168, %s170
      %p177 = scmp.eq.s32.totalorder %s29, 1
      %p178 = por %p176, %p177
      %p179 = scmp.ne.s32.totalorder %s170, %s171
      %p180 = scmp.eq.s32.totalorder %s29, 0
      %p181 = por %p179, %p180
      %p182 = scmp.ne.s32.totalorder %s170, %s171
      %p183 = scmp.eq.s32.totalorder %s30, 1
      %p184 = por %p182, %p183
      %p186 = scmp.ne.s32.totalorder %s171, %s185
      %p187 = scmp.eq.s32.totalorder %s30, 0
      %p188 = por %p186, %p187
      %s190 = sadd.s32 %s189, 1
      %p193 = scmp.eq.s32.totalorder %s24, 1
      %p194 = scmp.ne.s32.totalorder %s189, %s191
      %p195 = scmp.eq.s32.totalorder %s24, 0
      %p196 = por %p194, %p195
      %p197 = scmp.ne.s32.totalorder %s189, %s191
      %p198 = scmp.eq.s32.totalorder %s29, 1
      %p199 = por %p197, %p198
      %p200 = scmp.ne.s32.totalorder %s191, %s192
      %p201 = scmp.eq.s32.totalorder %s29, 0
      %p202 = por %p200, %p201
      %p203 = scmp.ne.s32.totalorder %s191, %s192
      %p204 = scmp.eq.s32.totalorder %s30, 1
      %p205 = por %p203, %p204
      %p207 = scmp.ne.s32.totalorder %s192, %s206
      %p208 = scmp.eq.s32.totalorder %s30, 0
      %p209 = por %p207, %p208
      %s210 = ssub.s32 %s24, %s31
      %p211 = scmp.eq.s32.totalorder %s210, 0
      %s213 = sadd.s32 %s212, 1
      %s214 = scalar_select %p211, %s212, %s213
      %p217 = pneg %p211
      %p218 = scmp.eq.s32.totalorder %s24, 1
      %p219 = por %p217, %p218
      %p220 = scmp.ne.s32.totalorder %s212, %s215
      %p221 = scmp.eq.s32.totalorder %s24, 0
      %p222 = por %p220, %p221
      %p223 = scmp.ne.s32.totalorder %s212, %s215
      %p224 = scmp.eq.s32.totalorder %s29, 1
      %p225 = por %p223, %p224
      %p226 = scmp.ne.s32.totalorder %s215, %s216
      %p227 = scmp.eq.s32.totalorder %s29, 0
      %p228 = por %p226, %p227
      %p229 = scmp.ne.s32.totalorder %s215, %s216
      %p230 = scmp.eq.s32.totalorder %s30, 1
      %p231 = por %p229, %p230
      %p233 = scmp.ne.s32.totalorder %s216, %s232
      %p234 = scmp.eq.s32.totalorder %s30, 0
      %p235 = por %p233, %p234
      %p236 = scmp.le.s32.totalorder 1, %s24
      %p237 = scmp.lt.s32.totalorder %s24, 3
      %p238 = pnand %p236, %p237
      %p239 = pneg %p238
      // Predicated region
      $region9: #{tpu_custom_call.1} parent=5 // pred_check
        _
      $region10: #{tpu_custom_call.1} parent=5 // pred_check_branch
        %241 = sbr.rel (%p238) target = $region12
      $region11: #{tpu_custom_call.1} parent=5 // pred_region
        %s242 = ssub.s32 %s24, 1
        // Predicated region
        $region13: #{tpu_custom_call.1} parent=11 // pred_check
          %p243 = pneg %p97
        $region14: #{tpu_custom_call.1} parent=11 // pred_check_branch
          %245 = sbr.rel (%p243) target = $region16
        $region15: #{tpu_custom_call.1} parent=11 // pred_region
          %s247 = ssub.s32 64, 64
          %248 = vsyncadd [#allocation6], %s247
          %s250 = sshll.u32 [#allocation7], 4
          %s251 = int_to_ptr.vmem [resolvable:$true] %s250
          %253 = dma.hbm_to_vmem [thread:$0]  %s2, 64, %s251, [#allocation6]
        $region16: #{tpu_custom_call.1} parent=11 // pred_fallthru
          _
        // Predicated region
        $region17: #{tpu_custom_call.1} parent=11 // pred_check
          %p254 = pneg %p118
        $region18: #{tpu_custom_call.1} parent=11 // pred_check_branch
          %256 = sbr.rel (%p254) target = $region20
        $region19: #{tpu_custom_call.1} parent=11 // pred_region
          _
        $region20: #{tpu_custom_call.1} parent=11 // pred_fallthru
          _
        // Predicated region
        $region21: #{tpu_custom_call.1} parent=11 // pred_check
          %p257 = pneg %p139
        $region22: #{tpu_custom_call.1} parent=11 // pred_check_branch
          %259 = sbr.rel (%p257) target = $region24
        $region23: #{tpu_custom_call.1} parent=11 // pred_region
          %s261 = ssub.s32 64, 64
          %262 = vsyncadd [#allocation9], %s261
          %s264 = sshll.u32 [#allocation8], 4
          %s265 = int_to_ptr.vmem [resolvable:$true] %s264
          %267 = dma.hbm_to_vmem [thread:$0]  %s4, 64, %s265, [#allocation9]
        $region24: #{tpu_custom_call.1} parent=11 // pred_fallthru
          _
        // Predicated region
        $region25: #{tpu_custom_call.1} parent=11 // pred_check
          %p268 = pneg %p160
        $region26: #{tpu_custom_call.1} parent=11 // pred_check_branch
          %270 = sbr.rel (%p268) target = $region28
        $region27: #{tpu_custom_call.1} parent=11 // pred_region
          _
        $region28: #{tpu_custom_call.1} parent=11 // pred_fallthru
          _
        // Predicated region
        $region29: #{tpu_custom_call.1} parent=11 // pred_check
          %p271 = pneg %p181
        $region30: #{tpu_custom_call.1} parent=11 // pred_check_branch
          %273 = sbr.rel (%p271) target = $region32
        $region31: #{tpu_custom_call.1} parent=11 // pred_region
          %s275 = ssub.s32 64, 64
          %276 = vsyncadd [#allocation9], %s275
          %s278 = sshll.u32 [#allocation10], 4
          %s279 = int_to_ptr.vmem [resolvable:$true] %s278
          %281 = dma.hbm_to_vmem [thread:$0]  %s6, 64, %s279, [#allocation9]
        $region32: #{tpu_custom_call.1} parent=11 // pred_fallthru
          _
        // Predicated region
        $region33: #{tpu_custom_call.1} parent=11 // pred_check
          %p282 = pneg %p202
        $region34: #{tpu_custom_call.1} parent=11 // pred_check_branch
          %284 = sbr.rel (%p282) target = $region36
        $region35: #{tpu_custom_call.1} parent=11 // pred_region
          _
        $region36: #{tpu_custom_call.1} parent=11 // pred_fallthru
          _
      $region12: #{tpu_custom_call.1} parent=5 // pred_fallthru
        _
      %p285 = scmp.lt.s32.totalorder %s24, 2
      // Predicated region
      $region37: #{tpu_custom_call.1} parent=5 // pred_check
        %p286 = pneg %p285
      $region38: #{tpu_custom_call.1} parent=5 // pred_check_branch
        %288 = sbr.rel (%p286) target = $region40
      $region39: #{tpu_custom_call.1} parent=5 // pred_region
        // Predicated region
        $region41: #{tpu_custom_call.1} parent=39 // pred_check
          %p289 = pneg %p44
        $region42: #{tpu_custom_call.1} parent=39 // pred_check_branch
          %291 = sbr.rel (%p289) target = $region44
        $region43: #{tpu_custom_call.1} parent=39 // pred_region
          %s292 = sand.u32 %s34, 1
          %s293 = scalar_lea.sflag [#allocation3], %s292
          %s294 = sand.u32 %s34, 1
          %s295 = smul.addr %s294, 64
          %s296 = scalar_lea.vmem [#allocation2], %s295
          %s298 = ssub.s32 1024, 1024
          %299 = vsyncadd %s293, %s298
          %s300 = smul.addr %s24, 8
          %s301 = smul.addr %s300, 128
          %s302 = scalar_lea.hbm %s0, %s301
          %s303 = sshll.u32 %s296, 4
          %s304 = int_to_ptr.vmem [resolvable:$true] %s303
          %309 = dma.hbm_to_vmem [thread:$0]  %s302, 1024, %s304, %s293, 128, 128, 8
        $region44: #{tpu_custom_call.1} parent=39 // pred_fallthru
          _
        // Predicated region
        $region45: #{tpu_custom_call.1} parent=39 // pred_check
          %p310 = pneg %p70
        $region46: #{tpu_custom_call.1} parent=39 // pred_check_branch
          %312 = sbr.rel (%p310) target = $region48
        $region47: #{tpu_custom_call.1} parent=39 // pred_region
          %s313 = sand.u32 %s24, 1
          %s314 = scalar_lea.sflag [#allocation6], %s313
          %s315 = sand.u32 %s60, 1
          %s316 = smul.addr %s315, 64
          %s317 = scalar_lea.vmem [#allocation5], %s316
          %s319 = ssub.s32 1024, 1024
          %320 = vsyncadd %s314, %s319
          %s321 = smul.addr %s24, 8
          %s322 = smul.addr %s321, 128
          %s323 = scalar_lea.hbm %s1, %s322
          %s324 = sshll.u32 %s317, 4
          %s325 = int_to_ptr.vmem [resolvable:$true] %s324
          %330 = dma.hbm_to_vmem [thread:$0]  %s323, 1024, %s325, %s314, 128, 128, 8
        $region48: #{tpu_custom_call.1} parent=39 // pred_fallthru
          _
      $region40: #{tpu_custom_call.1} parent=5 // pred_fallthru
        _
      %p331 = scmp.le.s32.totalorder 1, %s24
      %p332 = scmp.lt.s32.totalorder %s24, 3
      %p333 = pnand %p331, %p332
      %p334 = pneg %p333
      // Predicated region
      $region49: #{tpu_custom_call.1} parent=5 // pred_check
        _
      $region50: #{tpu_custom_call.1} parent=5 // pred_check_branch
        %336 = sbr.rel (%p333) target = $region52
      $region51: #{tpu_custom_call.1} parent=5 // pred_region
        %s337 = ssub.s32 %s24, 1
        %s338 = sand.u32 %s37, 1
        %s339 = scalar_lea.sflag [#allocation3], %s338
        %s340 = sand.u32 %s37, 1
        %s341 = smul.addr %s340, 64
        %s342 = scalar_lea.vmem [#allocation2], %s341
        // Predicated region
        $region53: #{tpu_custom_call.1} parent=51 // pred_check
          %p343 = pneg %p50
        $region54: #{tpu_custom_call.1} parent=51 // pred_check_branch
          %345 = sbr.rel (%p343) target = $region56
        $region55: #{tpu_custom_call.1} parent=51 // pred_region
          %346 = dma.done %s339, 1024
        $region56: #{tpu_custom_call.1} parent=51 // pred_fallthru
          _
        %s347 = sand.u32 %s29, 1
        %s348 = scalar_lea.sflag [#allocation6], %s347
        %s349 = sand.u32 %s63, 1
        %s350 = smul.addr %s349, 64
        %s351 = scalar_lea.vmem [#allocation5], %s350
        // Predicated region
        $region57: #{tpu_custom_call.1} parent=51 // pred_check
          %p352 = pneg %p76
        $region58: #{tpu_custom_call.1} parent=51 // pred_check_branch
          %354 = sbr.rel (%p352) target = $region60
        $region59: #{tpu_custom_call.1} parent=51 // pred_region
          %355 = dma.done %s348, 1024
        $region60: #{tpu_custom_call.1} parent=51 // pred_fallthru
          _
        // Predicated region
        $region61: #{tpu_custom_call.1} parent=51 // pred_check
          %p356 = pneg %p97
        $region62: #{tpu_custom_call.1} parent=51 // pred_check_branch
          %358 = sbr.rel (%p356) target = $region64
        $region63: #{tpu_custom_call.1} parent=51 // pred_region
          %359 = dma.done [#allocation6], 64
        $region64: #{tpu_custom_call.1} parent=51 // pred_fallthru
          _
        // Predicated region
        $region65: #{tpu_custom_call.1} parent=51 // pred_check
          %p360 = pneg %p139
        $region66: #{tpu_custom_call.1} parent=51 // pred_check_branch
          %362 = sbr.rel (%p360) target = $region68
        $region67: #{tpu_custom_call.1} parent=51 // pred_region
          %363 = dma.done [#allocation9], 64
        $region68: #{tpu_custom_call.1} parent=51 // pred_fallthru
          _
        // Predicated region
        $region69: #{tpu_custom_call.1} parent=51 // pred_check
          %p364 = pneg %p181
        $region70: #{tpu_custom_call.1} parent=51 // pred_check_branch
          %366 = sbr.rel (%p364) target = $region72
        $region71: #{tpu_custom_call.1} parent=51 // pred_region
          %367 = dma.done [#allocation9], 64
        $region72: #{tpu_custom_call.1} parent=51 // pred_fallthru
          _
        %s368 = sand.u32 %s37, 1
        %s369 = scalar_lea.sflag [#allocation3], %s368
        %s370 = sand.u32 %s37, 1
        %s371 = smul.addr %s370, 64
        %s372 = scalar_lea.vmem [#allocation2], %s371
        %p373 = pneg %p50
        %p374 = pneg %p47
        %s375 = sand.u32 %s29, 1
        %s376 = scalar_lea.sflag [#allocation6], %s375
        %s377 = sand.u32 %s63, 1
        %s378 = smul.addr %s377, 64
        %s379 = scalar_lea.vmem [#allocation5], %s378
        %p380 = pneg %p76
        %p381 = pneg %p73
        %p382 = pneg %p97
        %p383 = pneg %p94
        %p384 = pneg %p118
        %p385 = pneg %p115
        %p386 = pneg %p139
        %p387 = pneg %p136
        %p388 = pneg %p160
        %p389 = pneg %p157
        %p390 = pneg %p181
        %p391 = pneg %p178
        %p392 = pneg %p202
        %p393 = pneg %p199
        %p394 = pneg %p228
        %p395 = pneg %p225
        %s396 = sand.u32 %s215, 1
        %s397 = scalar_lea.sflag [#allocation4], %s396
        %s398 = sand.u32 %s215, 1
        %s399 = smul.addr %s398, 4
        %s400 = scalar_lea.vmem [#allocation11], %s399
        %v401 = vld [vmem:[%s342] sm:$0xff]
        %v402 = vld [vmem:[%s342 + $0x8] sm:$0xff]
        %v403 = vld [vmem:[%s342 + $0x10] sm:$0xff]
        %v404 = vld [vmem:[%s342 + $0x18] sm:$0xff]
        %v405 = vld [vmem:[%s342 + $0x20] sm:$0xff]
        %v406 = vld [vmem:[%s342 + $0x28] sm:$0xff]
        %v407 = vld [vmem:[%s342 + $0x30] sm:$0xff]
        %v408 = vld [vmem:[%s342 + $0x38] sm:$0xff]
        %v409 = vld [vmem:[%s351] sm:$0xff]
        %v410 = vld [vmem:[%s351 + $0x8] sm:$0xff]
        %v411 = vld [vmem:[%s351 + $0x10] sm:$0xff]
        %v412 = vld [vmem:[%s351 + $0x18] sm:$0xff]
        %v413 = vld [vmem:[%s351 + $0x20] sm:$0xff]
        %v414 = vld [vmem:[%s351 + $0x28] sm:$0xff]
        %v415 = vld [vmem:[%s351 + $0x30] sm:$0xff]
        %v416 = vld [vmem:[%s351 + $0x38] sm:$0xff]
        %v417 = vsub.f32 %v401, %v409
        %v418 = vsub.f32 %v402, %v410
        %v419 = vsub.f32 %v403, %v411
        %v420 = vsub.f32 %v404, %v412
        %v421 = vsub.f32 %v405, %v413
        %v422 = vsub.f32 %v406, %v414
        %v423 = vsub.f32 %v407, %v415
        %v424 = vsub.f32 %v408, %v416
        %vm425 = vcmask 130048
        %v426 = vsel %vm425, %v417, 0.0
        %v427 = vsel %vm425, %v419, 0.0
        %v428 = vadd.f32 %v426, %v427
        %v429 = vsel %vm425, %v421, 0.0
        %v430 = vadd.f32 %v428, %v429
        %v431 = vsel %vm425, %v423, 0.0
        %v432 = vadd.f32 %v430, %v431
        %v433 = vsel %vm425, %v418, 0.0
        %v434 = vsel %vm425, %v420, 0.0
        %v435 = vadd.f32 %v433, %v434
        %v436 = vsel %vm425, %v422, 0.0
        %v437 = vadd.f32 %v435, %v436
        %v438 = vsel %vm425, %v424, 0.0
        %v439 = vadd.f32 %v437, %v438
        %v440 = vld [vmem:[#allocation7] sm:$0xf]
        %v442 = vsel %vm425, %v440, 0
        %444 = vmatprep.subr.mxu0 0.0
        %445 = vmatpush1.msra.mxu0 0.0
        %446 = vmatprep.subr.mxu0 0.0
        %447 = vmatpush1.msra.mxu0 0.0
        %448 = vmatprep.subr.mxu0 0.0
        %449 = vmatpush1.msra.mxu0 0.0
        %450 = vmatprep.subr.mxu0 0.0
        %451 = vmatpush1.msra.mxu0 0.0
        %452 = vmatprep.subr.mxu0 0.0
        %453 = vmatpush1.msra.mxu0 0.0
        %454 = vmatprep.subr.mxu0 0.0
        %455 = vmatpush1.msra.mxu0 0.0
        %456 = vmatprep.subr.mxu0 0.0
        %457 = vmatpush1.msra.mxu0 0.0
        %458 = vmatprep.subr.mxu0 0.0
        %459 = vmatpush1.msra.mxu0 0.0
        %460 = vmatprep.subr.mxu0 0.0
        %461 = vmatpush1.msra.mxu0 0.0
        %462 = vmatprep.subr.mxu0 0.0
        %463 = vmatpush1.msra.mxu0 0.0
        %464 = vmatprep.subr.mxu0 0.0
        %465 = vmatpush1.msra.mxu0 0.0
        %466 = vmatprep.subr.mxu0 0.0
        %467 = vmatpush1.msra.mxu0 0.0
        %468 = vmatprep.subr.mxu0 0.0
        %469 = vmatpush1.msra.mxu0 0.0
        %470 = vmatprep.subr.mxu0 0.0
        %471 = vmatpush1.msra.mxu0 0.0
        %472 = vmatprep.subr.mxu0 0.0
        %473 = vmatpush1.msra.mxu0 %v439
        %474 = vmatprep.subr.mxu0 0.0
        %475 = vmatpush1.msra.mxu0 %v432
        %476 = vmatprep.subr.mxu0 0.0
        %477 = vmatpush2.msra.mxu0 0.0
        %478 = vmatprep.subr.mxu0 0.0
        %479 = vmatpush2.msra.mxu0 0.0
        %480 = vmatprep.subr.mxu0 0.0
        %481 = vmatpush2.msra.mxu0 0.0
        %482 = vmatprep.subr.mxu0 0.0
        %483 = vmatpush2.msra.mxu0 0.0
        %484 = vmatprep.subr.mxu0 0.0
        %485 = vmatpush2.msra.mxu0 0.0
        %486 = vmatprep.subr.mxu0 0.0
        %487 = vmatpush2.msra.mxu0 0.0
        %488 = vmatprep.subr.mxu0 0.0
        %489 = vmatpush2.msra.mxu0 0.0
        %490 = vmatprep.subr.mxu0 0.0
        %491 = vmatpush2.msra.mxu0 0.0
        %492 = vmatprep.subr.mxu0 0.0
        %493 = vmatpush2.msra.mxu0 0.0
        %494 = vmatprep.subr.mxu0 0.0
        %495 = vmatpush2.msra.mxu0 0.0
        %496 = vmatprep.subr.mxu0 0.0
        %497 = vmatpush2.msra.mxu0 0.0
        %498 = vmatprep.subr.mxu0 0.0
        %499 = vmatpush2.msra.mxu0 0.0
        %500 = vmatprep.subr.mxu0 0.0
        %501 = vmatpush2.msra.mxu0 0.0
        %502 = vmatprep.subr.mxu0 0.0
        %503 = vmatpush2.msra.mxu0 0.0
        %504 = vmatprep.subr.mxu0 0.0
        %505 = vmatpush2.msra.mxu0 0.0
        %506 = vmatprep.subr.mxu0 0.0
        %507 = vmatpush2.msra.mxu0 0.0
        %508 = vmatprep.mubr.f32.mxu0 0.0
        %509 = vmatmul.mubr.f32.gmra.mxu0 %v442
        %v510 = vpop.f32.mrf.mxu0
        %v511 = vadd.f32 0.0, %v510
        %v512 = vpop.f32.mrf.mxu0
        %513 = vdwg.mxu0
        %v514 = vld [vmem:[%s3] sm:$0xf]
        %v516 = vsel %vm425, %v511, 0
        %v519 = vsel %vm425, %v514, 0
        %521 = vmatprep.subr.mxu0 0.0
        %522 = vmatpush1.xpose.msra.mxu0 0.0
        %523 = vmatprep.subr.mxu0 0.0
        %524 = vmatpush1.xpose.msra.mxu0 0.0
        %525 = vmatprep.subr.mxu0 0.0
        %526 = vmatpush1.xpose.msra.mxu0 0.0
        %527 = vmatprep.subr.mxu0 0.0
        %528 = vmatpush1.xpose.msra.mxu0 0.0
        %529 = vmatprep.subr.mxu0 0.0
        %530 = vmatpush1.xpose.msra.mxu0 0.0
        %531 = vmatprep.subr.mxu0 0.0
        %532 = vmatpush1.xpose.msra.mxu0 0.0
        %533 = vmatprep.subr.mxu0 0.0
        %534 = vmatpush1.xpose.msra.mxu0 0.0
        %535 = vmatprep.subr.mxu0 0.0
        %536 = vmatpush1.xpose.msra.mxu0 0.0
        %537 = vmatprep.subr.mxu0 0.0
        %538 = vmatpush1.xpose.msra.mxu0 0.0
        %539 = vmatprep.subr.mxu0 0.0
        %540 = vmatpush1.xpose.msra.mxu0 0.0
        %541 = vmatprep.subr.mxu0 0.0
        %542 = vmatpush1.xpose.msra.mxu0 0.0
        %543 = vmatprep.subr.mxu0 0.0
        %544 = vmatpush1.xpose.msra.mxu0 0.0
        %545 = vmatprep.subr.mxu0 0.0
        %546 = vmatpush1.xpose.msra.mxu0 0.0
        %547 = vmatprep.subr.mxu0 0.0
        %548 = vmatpush1.xpose.msra.mxu0 0.0
        %549 = vmatprep.subr.mxu0 0.0
        %550 = vmatpush1.xpose.msra.mxu0 0.0
        %551 = vmatprep.subr.mxu0 0.0
        %552 = vmatpush1.xpose.msra.mxu0 %v519
        %553 = vmatprep.subr.mxu0 0.0
        %554 = vmatpush2.xpose.msra.mxu0 0.0
        %555 = vmatprep.subr.mxu0 0.0
        %556 = vmatpush2.xpose.msra.mxu0 0.0
        %557 = vmatprep.subr.mxu0 0.0
        %558 = vmatpush2.xpose.msra.mxu0 0.0
        %559 = vmatprep.subr.mxu0 0.0
        %560 = vmatpush2.xpose.msra.mxu0 0.0
        %561 = vmatprep.subr.mxu0 0.0
        %562 = vmatpush2.xpose.msra.mxu0 0.0
        %563 = vmatprep.subr.mxu0 0.0
        %564 = vmatpush2.xpose.msra.mxu0 0.0
        %565 = vmatprep.subr.mxu0 0.0
        %566 = vmatpush2.xpose.msra.mxu0 0.0
        %567 = vmatprep.subr.mxu0 0.0
        %568 = vmatpush2.xpose.msra.mxu0 0.0
        %569 = vmatprep.subr.mxu0 0.0
        %570 = vmatpush2.xpose.msra.mxu0 0.0
        %571 = vmatprep.subr.mxu0 0.0
        %572 = vmatpush2.xpose.msra.mxu0 0.0
        %573 = vmatprep.subr.mxu0 0.0
        %574 = vmatpush2.xpose.msra.mxu0 0.0
        %575 = vmatprep.subr.mxu0 0.0
        %576 = vmatpush2.xpose.msra.mxu0 0.0
        %577 = vmatprep.subr.mxu0 0.0
        %578 = vmatpush2.xpose.msra.mxu0 0.0
        %579 = vmatprep.subr.mxu0 0.0
        %580 = vmatpush2.xpose.msra.mxu0 0.0
        %581 = vmatprep.subr.mxu0 0.0
        %582 = vmatpush2.xpose.msra.mxu0 0.0
        %583 = vmatprep.subr.mxu0 0.0
        %584 = vmatpush2.xpose.msra.mxu0 0.0
        %585 = vmatprep.mubr.f32.mxu0 0.0
        %586 = vmatmul.mubr.f32.gmra.mxu0 %v516
        %v587 = vpop.f32.mrf.mxu0
        %v588 = vadd.f32 0.0, %v587
        %v589 = vpop.f32.mrf.mxu0
        %590 = vdwg.mxu0
        %v591 = vld [vmem:[#allocation8] sm:$0xf]
        %vm592 = vcmask 31744
        %v594 = vsel %vm592, %v588, 0
        %vm596 = vcmask 1043456
        %v598 = vsel %vm596, %v591, 0
        %600 = vmatprep.subr.mxu0 0.0
        %601 = vmatpush1.msra.mxu0 0.0
        %602 = vmatprep.subr.mxu0 0.0
        %603 = vmatpush1.msra.mxu0 0.0
        %604 = vmatprep.subr.mxu0 0.0
        %605 = vmatpush1.msra.mxu0 0.0
        %606 = vmatprep.subr.mxu0 0.0
        %607 = vmatpush1.msra.mxu0 0.0
        %608 = vmatprep.subr.mxu0 0.0
        %609 = vmatpush1.msra.mxu0 0.0
        %610 = vmatprep.subr.mxu0 0.0
        %611 = vmatpush1.msra.mxu0 0.0
        %612 = vmatprep.subr.mxu0 0.0
        %613 = vmatpush1.msra.mxu0 0.0
        %614 = vmatprep.subr.mxu0 0.0
        %615 = vmatpush1.msra.mxu0 0.0
        %616 = vmatprep.subr.mxu0 0.0
        %617 = vmatpush1.msra.mxu0 0.0
        %618 = vmatprep.subr.mxu0 0.0
        %619 = vmatpush1.msra.mxu0 0.0
        %620 = vmatprep.subr.mxu0 0.0
        %621 = vmatpush1.msra.mxu0 0.0
        %622 = vmatprep.subr.mxu0 0.0
        %623 = vmatpush1.msra.mxu0 0.0
        %624 = vmatprep.subr.mxu0 0.0
        %625 = vmatpush1.msra.mxu0 0.0
        %626 = vmatprep.subr.mxu0 0.0
        %627 = vmatpush1.msra.mxu0 0.0
        %628 = vmatprep.subr.mxu0 0.0
        %629 = vmatpush1.msra.mxu0 0.0
        %630 = vmatprep.subr.mxu0 0.0
        %631 = vmatpush1.msra.mxu0 %v598
        %632 = vmatprep.subr.mxu0 0.0
        %633 = vmatpush2.msra.mxu0 0.0
        %634 = vmatprep.subr.mxu0 0.0
        %635 = vmatpush2.msra.mxu0 0.0
        %636 = vmatprep.subr.mxu0 0.0
        %637 = vmatpush2.msra.mxu0 0.0
        %638 = vmatprep.subr.mxu0 0.0
        %639 = vmatpush2.msra.mxu0 0.0
        %640 = vmatprep.subr.mxu0 0.0
        %641 = vmatpush2.msra.mxu0 0.0
        %642 = vmatprep.subr.mxu0 0.0
        %643 = vmatpush2.msra.mxu0 0.0
        %644 = vmatprep.subr.mxu0 0.0
        %645 = vmatpush2.msra.mxu0 0.0
        %646 = vmatprep.subr.mxu0 0.0
        %647 = vmatpush2.msra.mxu0 0.0
        %648 = vmatprep.subr.mxu0 0.0
        %649 = vmatpush2.msra.mxu0 0.0
        %650 = vmatprep.subr.mxu0 0.0
        %651 = vmatpush2.msra.mxu0 0.0
        %652 = vmatprep.subr.mxu0 0.0
        %653 = vmatpush2.msra.mxu0 0.0
        %654 = vmatprep.subr.mxu0 0.0
        %655 = vmatpush2.msra.mxu0 0.0
        %656 = vmatprep.subr.mxu0 0.0
        %657 = vmatpush2.msra.mxu0 0.0
        %658 = vmatprep.subr.mxu0 0.0
        %659 = vmatpush2.msra.mxu0 0.0
        %660 = vmatprep.subr.mxu0 0.0
        %661 = vmatpush2.msra.mxu0 0.0
        %662 = vmatprep.subr.mxu0 0.0
        %663 = vmatpush2.msra.mxu0 0.0
        %664 = vmatprep.mubr.f32.mxu0 0.0
        %665 = vmatmul.mubr.f32.gmra.mxu0 %v594
        %v666 = vpop.f32.mrf.mxu0
        %v667 = vadd.f32 0.0, %v666
        %v668 = vpop.f32.mrf.mxu0
        %669 = vdwg.mxu0
        %v670 = vld [vmem:[%s5] sm:$0xf]
        %v672 = vsel %vm596, %v670, 0
        %674 = vmatprep.subr.mxu0 0.0
        %675 = vmatpush1.msra.mxu0 0.0
        %676 = vmatprep.subr.mxu0 0.0
        %677 = vmatpush1.msra.mxu0 0.0
        %678 = vmatprep.subr.mxu0 0.0
        %679 = vmatpush1.msra.mxu0 0.0
        %680 = vmatprep.subr.mxu0 0.0
        %681 = vmatpush1.msra.mxu0 0.0
        %682 = vmatprep.subr.mxu0 0.0
        %683 = vmatpush1.msra.mxu0 0.0
        %684 = vmatprep.subr.mxu0 0.0
        %685 = vmatpush1.msra.mxu0 0.0
        %686 = vmatprep.subr.mxu0 0.0
        %687 = vmatpush1.msra.mxu0 0.0
        %688 = vmatprep.subr.mxu0 0.0
        %689 = vmatpush1.msra.mxu0 0.0
        %690 = vmatprep.subr.mxu0 0.0
        %691 = vmatpush1.msra.mxu0 0.0
        %692 = vmatprep.subr.mxu0 0.0
        %693 = vmatpush1.msra.mxu0 0.0
        %694 = vmatprep.subr.mxu0 0.0
        %695 = vmatpush1.msra.mxu0 0.0
        %696 = vmatprep.subr.mxu0 0.0
        %697 = vmatpush1.msra.mxu0 0.0
        %698 = vmatprep.subr.mxu0 0.0
        %699 = vmatpush1.msra.mxu0 0.0
        %700 = vmatprep.subr.mxu0 0.0
        %701 = vmatpush1.msra.mxu0 0.0
        %702 = vmatprep.subr.mxu0 0.0
        %703 = vmatpush1.msra.mxu0 0.0
        %704 = vmatprep.subr.mxu0 0.0
        %705 = vmatpush1.msra.mxu0 %v672
        %706 = vmatprep.subr.mxu0 0.0
        %707 = vmatpush2.msra.mxu0 0.0
        %708 = vmatprep.subr.mxu0 0.0
        %709 = vmatpush2.msra.mxu0 0.0
        %710 = vmatprep.subr.mxu0 0.0
        %711 = vmatpush2.msra.mxu0 0.0
        %712 = vmatprep.subr.mxu0 0.0
        %713 = vmatpush2.msra.mxu0 0.0
        %714 = vmatprep.subr.mxu0 0.0
        %715 = vmatpush2.msra.mxu0 0.0
        %716 = vmatprep.subr.mxu0 0.0
        %717 = vmatpush2.msra.mxu0 0.0
        %718 = vmatprep.subr.mxu0 0.0
        %719 = vmatpush2.msra.mxu0 0.0
        %720 = vmatprep.subr.mxu0 0.0
        %721 = vmatpush2.msra.mxu0 0.0
        %722 = vmatprep.subr.mxu0 0.0
        %723 = vmatpush2.msra.mxu0 0.0
        %724 = vmatprep.subr.mxu0 0.0
        %725 = vmatpush2.msra.mxu0 0.0
        %726 = vmatprep.subr.mxu0 0.0
        %727 = vmatpush2.msra.mxu0 0.0
        %728 = vmatprep.subr.mxu0 0.0
        %729 = vmatpush2.msra.mxu0 0.0
        %730 = vmatprep.subr.mxu0 0.0
        %731 = vmatpush2.msra.mxu0 0.0
        %732 = vmatprep.subr.mxu0 0.0
        %733 = vmatpush2.msra.mxu0 0.0
        %734 = vmatprep.subr.mxu0 0.0
        %735 = vmatpush2.msra.mxu0 0.0
        %736 = vmatprep.subr.mxu0 0.0
        %737 = vmatpush2.msra.mxu0 0.0
        %738 = vmatprep.mubr.f32.mxu0 0.0
        %739 = vmatmul.mubr.f32.gmra.mxu0 %v594
        %v740 = vpop.f32.mrf.mxu0
        %v741 = vadd.f32 0.0, %v740
        %v742 = vpop.f32.mrf.mxu0
        %743 = vdwg.mxu0
        %v744 = vld [vmem:[#allocation10] sm:$0xf]
        %v746 = vsel %vm592, %v744, 0
        %v748 = vsel %vm596, %v588, 0
        %750 = vmatprep.subr.mxu0 0.0
        %751 = vmatpush1.msra.mxu0 0.0
        %752 = vmatprep.subr.mxu0 0.0
        %753 = vmatpush1.msra.mxu0 0.0
        %754 = vmatprep.subr.mxu0 0.0
        %755 = vmatpush1.msra.mxu0 0.0
        %756 = vmatprep.subr.mxu0 0.0
        %757 = vmatpush1.msra.mxu0 0.0
        %758 = vmatprep.subr.mxu0 0.0
        %759 = vmatpush1.msra.mxu0 0.0
        %760 = vmatprep.subr.mxu0 0.0
        %761 = vmatpush1.msra.mxu0 0.0
        %762 = vmatprep.subr.mxu0 0.0
        %763 = vmatpush1.msra.mxu0 0.0
        %764 = vmatprep.subr.mxu0 0.0
        %765 = vmatpush1.msra.mxu0 0.0
        %766 = vmatprep.subr.mxu0 0.0
        %767 = vmatpush1.msra.mxu0 0.0
        %768 = vmatprep.subr.mxu0 0.0
        %769 = vmatpush1.msra.mxu0 0.0
        %770 = vmatprep.subr.mxu0 0.0
        %771 = vmatpush1.msra.mxu0 0.0
        %772 = vmatprep.subr.mxu0 0.0
        %773 = vmatpush1.msra.mxu0 0.0
        %774 = vmatprep.subr.mxu0 0.0
        %775 = vmatpush1.msra.mxu0 0.0
        %776 = vmatprep.subr.mxu0 0.0
        %777 = vmatpush1.msra.mxu0 0.0
        %778 = vmatprep.subr.mxu0 0.0
        %779 = vmatpush1.msra.mxu0 0.0
        %780 = vmatprep.subr.mxu0 0.0
        %781 = vmatpush1.msra.mxu0 %v748
        %782 = vmatprep.subr.mxu0 0.0
        %783 = vmatpush2.msra.mxu0 0.0
        %784 = vmatprep.subr.mxu0 0.0
        %785 = vmatpush2.msra.mxu0 0.0
        %786 = vmatprep.subr.mxu0 0.0
        %787 = vmatpush2.msra.mxu0 0.0
        %788 = vmatprep.subr.mxu0 0.0
        %789 = vmatpush2.msra.mxu0 0.0
        %790 = vmatprep.subr.mxu0 0.0
        %791 = vmatpush2.msra.mxu0 0.0
        %792 = vmatprep.subr.mxu0 0.0
        %793 = vmatpush2.msra.mxu0 0.0
        %794 = vmatprep.subr.mxu0 0.0
        %795 = vmatpush2.msra.mxu0 0.0
        %796 = vmatprep.subr.mxu0 0.0
        %797 = vmatpush2.msra.mxu0 0.0
        %798 = vmatprep.subr.mxu0 0.0
        %799 = vmatpush2.msra.mxu0 0.0
        %800 = vmatprep.subr.mxu0 0.0
        %801 = vmatpush2.msra.mxu0 0.0
        %802 = vmatprep.subr.mxu0 0.0
        %803 = vmatpush2.msra.mxu0 0.0
        %804 = vmatprep.subr.mxu0 0.0
        %805 = vmatpush2.msra.mxu0 0.0
        %806 = vmatprep.subr.mxu0 0.0
        %807 = vmatpush2.msra.mxu0 0.0
        %808 = vmatprep.subr.mxu0 0.0
        %809 = vmatpush2.msra.mxu0 0.0
        %810 = vmatprep.subr.mxu0 0.0
        %811 = vmatpush2.msra.mxu0 0.0
        %812 = vmatprep.subr.mxu0 0.0
        %813 = vmatpush2.msra.mxu0 0.0
        %814 = vmatprep.mubr.f32.mxu0 0.0
        %815 = vmatmul.mubr.f32.gmra.mxu0 %v746
        %v816 = vpop.f32.mrf.mxu0
        %v817 = vadd.f32 0.0, %v816
        %v818 = vpop.f32.mrf.mxu0
        %819 = vdwg.mxu0
        %v820 = vld [vmem:[%s7] sm:$0xf]
        %v822 = vsel %vm592, %v820, 0
        %824 = vmatprep.subr.mxu0 0.0
        %825 = vmatpush1.msra.mxu0 0.0
        %826 = vmatprep.subr.mxu0 0.0
        %827 = vmatpush1.msra.mxu0 0.0
        %828 = vmatprep.subr.mxu0 0.0
        %829 = vmatpush1.msra.mxu0 0.0
        %830 = vmatprep.subr.mxu0 0.0
        %831 = vmatpush1.msra.mxu0 0.0
        %832 = vmatprep.subr.mxu0 0.0
        %833 = vmatpush1.msra.mxu0 0.0
        %834 = vmatprep.subr.mxu0 0.0
        %835 = vmatpush1.msra.mxu0 0.0
        %836 = vmatprep.subr.mxu0 0.0
        %837 = vmatpush1.msra.mxu0 0.0
        %838 = vmatprep.subr.mxu0 0.0
        %839 = vmatpush1.msra.mxu0 0.0
        %840 = vmatprep.subr.mxu0 0.0
        %841 = vmatpush1.msra.mxu0 0.0
        %842 = vmatprep.subr.mxu0 0.0
        %843 = vmatpush1.msra.mxu0 0.0
        %844 = vmatprep.subr.mxu0 0.0
        %845 = vmatpush1.msra.mxu0 0.0
        %846 = vmatprep.subr.mxu0 0.0
        %847 = vmatpush1.msra.mxu0 0.0
        %848 = vmatprep.subr.mxu0 0.0
        %849 = vmatpush1.msra.mxu0 0.0
        %850 = vmatprep.subr.mxu0 0.0
        %851 = vmatpush1.msra.mxu0 0.0
        %852 = vmatprep.subr.mxu0 0.0
        %853 = vmatpush1.msra.mxu0 0.0
        %854 = vmatprep.subr.mxu0 0.0
        %855 = vmatpush1.msra.mxu0 %v748
        %856 = vmatprep.subr.mxu0 0.0
        %857 = vmatpush2.msra.mxu0 0.0
        %858 = vmatprep.subr.mxu0 0.0
        %859 = vmatpush2.msra.mxu0 0.0
        %860 = vmatprep.subr.mxu0 0.0
        %861 = vmatpush2.msra.mxu0 0.0
        %862 = vmatprep.subr.mxu0 0.0
        %863 = vmatpush2.msra.mxu0 0.0
        %864 = vmatprep.subr.mxu0 0.0
        %865 = vmatpush2.msra.mxu0 0.0
        %866 = vmatprep.subr.mxu0 0.0
        %867 = vmatpush2.msra.mxu0 0.0
        %868 = vmatprep.subr.mxu0 0.0
        %869 = vmatpush2.msra.mxu0 0.0
        %870 = vmatprep.subr.mxu0 0.0
        %871 = vmatpush2.msra.mxu0 0.0
        %872 = vmatprep.subr.mxu0 0.0
        %873 = vmatpush2.msra.mxu0 0.0
        %874 = vmatprep.subr.mxu0 0.0
        %875 = vmatpush2.msra.mxu0 0.0
        %876 = vmatprep.subr.mxu0 0.0
        %877 = vmatpush2.msra.mxu0 0.0
        %878 = vmatprep.subr.mxu0 0.0
        %879 = vmatpush2.msra.mxu0 0.0
        %880 = vmatprep.subr.mxu0 0.0
        %881 = vmatpush2.msra.mxu0 0.0
        %882 = vmatprep.subr.mxu0 0.0
        %883 = vmatpush2.msra.mxu0 0.0
        %884 = vmatprep.subr.mxu0 0.0
        %885 = vmatpush2.msra.mxu0 0.0
        %886 = vmatprep.subr.mxu0 0.0
        %887 = vmatpush2.msra.mxu0 0.0
        %888 = vmatprep.mubr.f32.mxu0 0.0
        %889 = vmatmul.mubr.f32.gmra.mxu0 %v822
        %v890 = vpop.f32.mrf.mxu0
        %v891 = vadd.f32 0.0, %v890
        %v892 = vpop.f32.mrf.mxu0
        %893 = vdwg.mxu0
        %v894 = vsub.f32 %v588, %v667
        %v895 = vmul.f32 %v894, %v894
        %v896 = vsub.f32 %v588, %v741
        %v897 = vmul.f32 %v896, %v896
        %v898 = vadd.f32 %v895, %v897
        %v899 = vsub.f32 %v588, %v817
        %v900 = vmul.f32 %v899, %v899
        %v901 = vadd.f32 %v898, %v900
        %v902 = vsub.f32 %v588, %v891
        %v903 = vmul.f32 %v902, %v902
        %v904 = vadd.f32 %v901, %v903
        %vm905 = vcmask 27648
        %906 = vst.msk [vmem:[%s400] sm:$0xf] %vm905, %v904
        %s907 = sand.u32 %s215, 1
        %s908 = scalar_lea.sflag [#allocation4], %s907
        %s909 = sand.u32 %s215, 1
        %s910 = smul.addr %s909, 4
        %s911 = scalar_lea.vmem [#allocation11], %s910
        // Predicated region
        $region73: #{tpu_custom_call.1} parent=51 // pred_check
          %p912 = pneg %p225
        $region74: #{tpu_custom_call.1} parent=51 // pred_check_branch
          %914 = sbr.rel (%p912) target = $region76
        $region75: #{tpu_custom_call.1} parent=51 // pred_region
          %s916 = ssub.s32 64, 64
          %917 = vsyncadd %s908, %s916
          %s918 = smul.addr %s29, 64
          %s919 = scalar_lea.hbm %s8, %s918
          %s921 = sshll.u32 %s911, 4
          %s922 = int_to_ptr.vmem [resolvable:$true] %s921
          %924 = dma.vmem_to_hbm [thread:$0]  %s922, 64, %s919, %s908
        $region76: #{tpu_custom_call.1} parent=51 // pred_fallthru
          _
      $region52: #{tpu_custom_call.1} parent=5 // pred_fallthru
        _
      %p925 = scmp.le.s32.totalorder 2, %s24
      // Predicated region
      $region77: #{tpu_custom_call.1} parent=5 // pred_check
        %p926 = pneg %p925
      $region78: #{tpu_custom_call.1} parent=5 // pred_check_branch
        %928 = sbr.rel (%p926) target = $region80
      $region79: #{tpu_custom_call.1} parent=5 // pred_region
        %s929 = ssub.s32 %s24, 2
        // Predicated region
        $region81: #{tpu_custom_call.1} parent=79 // pred_check
          %p930 = pneg %p231
        $region82: #{tpu_custom_call.1} parent=79 // pred_check_branch
          %932 = sbr.rel (%p930) target = $region84
        $region83: #{tpu_custom_call.1} parent=79 // pred_region
          %s933 = sand.u32 %s216, 1
          %s934 = scalar_lea.sflag [#allocation4], %s933
          %s935 = sand.u32 %s216, 1
          %s936 = smul.addr %s935, 4
          %s937 = scalar_lea.vmem [#allocation11], %s936
          %938 = dma.done %s934, 64
        $region84: #{tpu_custom_call.1} parent=79 // pred_fallthru
          _
      $region80: #{tpu_custom_call.1} parent=5 // pred_fallthru
        _
    $region6: #{tpu_custom_call.1} parent=1 // loop_footer
      %s28 = sadd.s32 1, %s24
    $region7: #{tpu_custom_call.1} parent=1 // loop_footer_branch
      %23 = sbr.rel target = $region3
    $region8: #{tpu_custom_call.1} parent=1 // loop_exit
      _
    %939 = vsyncpa [#allocation3], 1
    %s940 = scalar_lea.sflag [#allocation3], 1
    %941 = vsyncpa %s940, 1
    %942 = vsyncpa [#allocation6], 1
    %s943 = scalar_lea.sflag [#allocation6], 1
    %944 = vsyncpa %s943, 1
    %945 = vsyncpa [#allocation9], 1
    %946 = vsyncpa [#allocation4], 1
    %s947 = scalar_lea.sflag [#allocation4], 1
    %948 = vsyncpa %s947, 1

</llo_original>
